<compile_context>
chip_gen: v7x
topology: tpu7x:2x2x1
jax: 0.10.0
libtpu: 0.0.40
codegen_flags: <defaults>
</compile_context>

<pallas_src>
import functools
import math

import numpy as np
import jax
import jax.numpy as jnp
from jax.experimental import pallas as pl
from jax.experimental.pallas import tpu as pltpu

LEAKY_SLOPE = 0.01  # torch.nn.LeakyReLU default negative_slope


def _softplus(x):
    # numerically-stable softplus
    return jnp.maximum(x, 0.0) + jnp.log(1.0 + jnp.exp(-jnp.abs(x)))


def _leaky_relu(x):
    return jnp.where(x > 0, x, LEAKY_SLOPE * x)


def _normalize(x, space):
    lo, hi = space
    return 2.0 * (x - lo) / (hi - lo) - 1.0


def _round_up(x, m):
    return ((x + m - 1) // m) * m


# ---------------------------------------------------------------------------
# Pallas kernel: fused ensemble MLP + aggregation for one batch tile.
# ---------------------------------------------------------------------------
def _ensemble_kernel(states_ref, actions_ref, mu_ref,
                     w1_ref, b1_ref, w2_ref, b2_ref, wh_ref, bh_ref,
                     maxlv_ref, minlv_ref, lsel_ref, rsel_ref,
                     out_ref, *,
                     ensemble_nets, state_dim, mu_dim,
                     state_lo, state_hi, action_lo, action_hi,
                     compute_dtype, out_pad):
    E, S = ensemble_nets, state_dim
    tile_n = states_ref.shape[0]

    # Fused input normalization + mean-field broadcast + concat.
    ns = 2.0 * (states_ref[...] - state_lo) / (state_hi - state_lo) - 1.0
    na = 2.0 * (actions_ref[...] - action_lo) / (action_hi - action_lo) - 1.0
    mu_b = jnp.broadcast_to(mu_ref[...], (tile_n, mu_dim))
    x = jnp.concatenate([ns, mu_b, na], axis=1).astype(compute_dtype)

    # All ensemble members fused into the N dimension (block-diagonal weights,
    # grid-resident and pre-cast in the wrapper).
    h = jnp.dot(x, w1_ref[...], preferred_element_type=jnp.float32) + b1_ref[...]
    h = _leaky_relu(h)
    h = jnp.dot(h.astype(compute_dtype), w2_ref[...],
                preferred_element_type=jnp.float32) + b2_ref[...]
    h = _leaky_relu(h)
    head = jnp.dot(h.astype(compute_dtype), wh_ref[...],
                   preferred_element_type=jnp.float32) + bh_ref[...]

    means_all = head[:, :E * S]      # member e -> cols [e*S, (e+1)*S)
    logvars_all = head[:, E * S:]    # same layout

    lv = maxlv_ref[...] - _softplus(maxlv_ref[...] - logvars_all)
    lv = minlv_ref[...] + _softplus(lv - minlv_ref[...])
    vars_all = jnp.exp(lv)           # [tile_n, E*S]

    inv_e = 1.0 / float(E)
    m_bar = means_all[:, 0:S]
    alea = vars_all[:, 0:S]
    for e in range(1, E):
        m_bar = m_bar + means_all[:, e * S:(e + 1) * S]
        alea = alea + vars_all[:, e * S:(e + 1) * S]
    m_bar = m_bar * inv_e
    alea = alea * inv_e

    # Centered epistemic covariance, lane-dense via constant selection matmuls:
    #   left[:, e*S*S + i*S + j]  = c_e[:, i]
    #   right[:, e*S*S + i*S + j] = c_e[:, j]
    m_bar_tiled = jnp.concatenate([m_bar] * E, axis=1)              # [tile_n, E*S]
    centered = means_all - m_bar_tiled
    left = jnp.dot(centered, lsel_ref[...], preferred_element_type=jnp.float32)
    right = jnp.dot(centered, rsel_ref[...], preferred_element_type=jnp.float32)
    prod = left * right                                             # [tile_n, E*S*S]
    epi = prod[:, :S * S]
    for e in range(1, E):
        epi = epi + prod[:, e * S * S:(e + 1) * S * S]
    # TODO(synk): for ensemble_nets == 1 the reference divides by 0 (NaN/inf);
    # we clamp the denominator to 1 instead.
    epi = epi * (1.0 / float(max(E - 1, 1)))

    # Single lane-dense packed write: [mean | aleatoric | epi_flat | zero pad]
    packed = jnp.concatenate([m_bar, alea, epi], axis=-1)
    if out_pad:
        packed = jnp.concatenate(
            [packed, jnp.zeros((tile_n, out_pad), packed.dtype)], axis=-1)
    out_ref[...] = packed


# ---------------------------------------------------------------------------
# Wrapper-side weight packing (done once, outside the kernel).
# ---------------------------------------------------------------------------
def _pack_params(params, *, ensemble_nets, compute_dtype):
    w1, b1, w2, b2, wm, bm, wl, bl, maxlv, minlv = params
    E = ensemble_nets
    w1_f = jnp.concatenate([w1[e] for e in range(E)], axis=1)            # [D, E*h1]
    b1_f = jnp.concatenate([b1[e] for e in range(E)], axis=1)            # [1, E*h1]
    w2_f = jax.scipy.linalg.block_diag(*[w2[e] for e in range(E)])       # [E*h1, E*h2]
    b2_f = jnp.concatenate([b2[e] for e in range(E)], axis=1)            # [1, E*h2]
    wm_bd = jax.scipy.linalg.block_diag(*[wm[e] for e in range(E)])      # [E*h2, E*S]
    wl_bd = jax.scipy.linalg.block_diag(*[wl[e] for e in range(E)])      # [E*h2, E*S]
    wh_f = jnp.concatenate([wm_bd, wl_bd], axis=1)                       # [E*h2, 2*E*S]
    bh_f = jnp.concatenate([bm[e] for e in range(E)] +
                           [bl[e] for e in range(E)], axis=1)            # [1, 2*E*S]
    maxlv_f = jnp.concatenate([maxlv[e] for e in range(E)], axis=1)      # [1, E*S]
    minlv_f = jnp.concatenate([minlv[e] for e in range(E)], axis=1)      # [1, E*S]
    return (w1_f.astype(compute_dtype), b1_f,
            w2_f.astype(compute_dtype), b2_f,
            wh_f.astype(compute_dtype), bh_f,
            maxlv_f, minlv_f)


def _covariance_selectors(ensemble_nets, state_dim):
    E, S = ensemble_nets, state_dim
    lsel = np.zeros((E * S, E * S * S), np.float32)
    rsel = np.zeros((E * S, E * S * S), np.float32)
    for e in range(E):
        for i in range(S):
            for j in range(S):
                col = e * S * S + i * S + j
                lsel[e * S + i, col] = 1.0
                rsel[e * S + j, col] = 1.0
    return jnp.asarray(lsel), jnp.asarray(rsel)


# ---------------------------------------------------------------------------
# Forward pass (matches UnknownDynamics.forward semantics).
# ---------------------------------------------------------------------------
def unknown_dynamics_forward(states, mu, actions, params, *,
                             ensemble_nets, state_dim,
                             state_space, action_space,
                             compute_dtype=jnp.float32,
                             tile_n_cap=4096):
    n = states.shape[0]
    S = state_dim
    A = actions.shape[1]
    mu_dim = mu.shape[0]
    E = ensemble_nets

    (w1_f, b1_f, w2_f, b2_f, wh_f, bh_f, maxlv_f, minlv_f) = _pack_params(
        params, ensemble_nets=E, compute_dtype=compute_dtype)
    lsel, rsel = _covariance_selectors(E, S)

    d_in, eh1 = w1_f.shape
    eh2 = w2_f.shape[1]

    # Batch tiling: large sublane-aligned tiles (grid-step overhead dominates
    # at these tiny feature dims); keep grid >= 2 when possible so the
    # "parallel" batch axis can shard across v7x's two TensorCores.
    n_pad8 = max(_round_up(n, 8), 8)
    tile_n = min(tile_n_cap, max(8, _round_up(-(-n_pad8 // 2), 8)))
    n_pad = _round_up(n, tile_n)
    if n_pad != n:
        pad = n_pad - n
        states_p = jnp.pad(states, ((0, pad), (0, 0)))
        actions_p = jnp.pad(actions, ((0, pad), (0, 0)))
    else:
        states_p, actions_p = states, actions

    out_width = 2 * S + S * S
    out_width_padded = _round_up(out_width, 128)     # lane-dense (unmasked) stores
    out_pad = out_width_padded - out_width

    kernel = functools.partial(
        _ensemble_kernel,
        ensemble_nets=E, state_dim=S, mu_dim=mu_dim,
        state_lo=float(state_space[0]), state_hi=float(state_space[1]),
        action_lo=float(action_space[0]), action_hi=float(action_space[1]),
        compute_dtype=compute_dtype, out_pad=out_pad)

    const = lambda i: (0, 0)   # grid-resident blocks (fetched once)
    grid_spec = pltpu.PrefetchScalarGridSpec(
        num_scalar_prefetch=0,
        grid=(n_pad // tile_n,),
        in_specs=[
            pl.BlockSpec((tile_n, S), lambda i: (i, 0)),        # states  (tiled on n)
            pl.BlockSpec((tile_n, A), lambda i: (i, 0)),        # actions (tiled on n)
            pl.BlockSpec((1, mu_dim), const),                   # mu
            pl.BlockSpec((d_in, eh1), const),                   # W1 fused [D, E*h1]
            pl.BlockSpec((1, eh1), const),                      # b1
            pl.BlockSpec((eh1, eh2), const),                    # W2 block-diag
            pl.BlockSpec((1, eh2), const),                      # b2
            pl.BlockSpec((eh2, 2 * E * S), const),              # W_head block-diag
            pl.BlockSpec((1, 2 * E * S), const),                # b_head
            pl.BlockSpec((1, E * S), const),                    # max_logvar
            pl.BlockSpec((1, E * S), const),                    # min_logvar
            pl.BlockSpec((E * S, E * S * S), const),            # covariance left sel
            pl.BlockSpec((E * S, E * S * S), const),            # covariance right sel
        ],
        out_specs=pl.BlockSpec((tile_n, out_width_padded), lambda i: (i, 0)),
    )

    packed = pl.pallas_call(
        kernel,
        out_shape=jax.ShapeDtypeStruct((n_pad, out_width_padded), jnp.float32),
        grid_spec=grid_spec,
        compiler_params=pltpu.CompilerParams(
            dimension_semantics=("parallel",)),      # batch axis shards across TCs
    )(states_p, actions_p, mu.reshape(1, mu_dim),
      w1_f, b1_f, w2_f, b2_f, wh_f, bh_f, maxlv_f, minlv_f, lsel, rsel)

    packed = packed[:n]
    out_means = packed[:, :S]
    out_aleatoric = packed[:, S:2 * S]
    out_epistemic = packed[:, 2 * S:out_width].reshape(n, S, S)

    # TODO(synk): StatsTracker is not defined in the source; identity diff
    # statistics (diff_mean=0, diff_std=1) are used deterministically.
    diff_mean, diff_std = 0.0, 1.0
    next_states = states + (out_means * diff_std + diff_mean)
    return next_states, out_epistemic * diff_std ** 2, out_aleatoric * diff_std ** 2


# ---------------------------------------------------------------------------
# Deterministic parameter init (xavier_uniform gain=sqrt(2), zero biases,
# max_logvar = +1, min_logvar = -1), mirroring EnsembleMember.init_layers.
# ---------------------------------------------------------------------------
def _xavier_uniform(key, fan_in, fan_out, gain):
    bound = gain * math.sqrt(6.0 / (fan_in + fan_out))
    return jax.random.uniform(key, (fan_in, fan_out), jnp.float32, -bound, bound)


def init_params(key, ensemble_nets, state_dim, mu_dim, action_dim, hidden_dims):
    total = state_dim + mu_dim + action_dim
    h1, h2 = hidden_dims
    gain = math.sqrt(2.0)
    w1s, w2s, wms, wls = [], [], [], []
    for _ in range(ensemble_nets):
        key, k1, k2, k3, k4 = jax.random.split(key, 5)
        w1s.append(_xavier_uniform(k1, total, h1, gain))
        w2s.append(_xavier_uniform(k2, h1, h2, gain))
        wms.append(_xavier_uniform(k3, h2, state_dim, gain))
        wls.append(_xavier_uniform(k4, h2, state_dim, gain))
    w1 = jnp.stack(w1s)
    w2 = jnp.stack(w2s)
    wm = jnp.stack(wms)
    wl = jnp.stack(wls)
    b1 = jnp.zeros((ensemble_nets, 1, h1), jnp.float32)
    b2 = jnp.zeros((ensemble_nets, 1, h2), jnp.float32)
    bm = jnp.zeros((ensemble_nets, 1, state_dim), jnp.float32)
    bl = jnp.zeros((ensemble_nets, 1, state_dim), jnp.float32)
    maxlv = jnp.ones((ensemble_nets, 1, state_dim), jnp.float32)
    minlv = -jnp.ones((ensemble_nets, 1, state_dim), jnp.float32)
    return (w1, b1, w2, b2, wm, bm, wl, bl, maxlv, minlv)


# ---------------------------------------------------------------------------
# Pure-JAX reference for validation.
# ---------------------------------------------------------------------------
def reference_forward(states, mu, actions, params, *,
                      ensemble_nets, state_space, action_space):
    w1, b1, w2, b2, wm, bm, wl, bl, maxlv, minlv = params
    n = states.shape[0]
    inputs = jnp.concatenate([
        _normalize(states, state_space),
        jnp.broadcast_to(mu[None, :], (n, mu.shape[0])),
        _normalize(actions, action_space)], axis=1)

    means, varss = [], []
    for e in range(ensemble_nets):
        h = _leaky_relu(inputs @ w1[e] + b1[e])
        h = _leaky_relu(h @ w2[e] + b2[e])
        m = h @ wm[e] + bm[e]
        lv = h @ wl[e] + bl[e]
        lv = maxlv[e] - _softplus(maxlv[e] - lv)
        lv = minlv[e] + _softplus(lv - minlv[e])
        means.append(m)
        varss.append(jnp.exp(lv))
    stacked = jnp.stack(means)                                   # [E, n, S]
    m_bar = stacked.mean(axis=0)                                 # [n, S]
    centered = stacked - m_bar
    epi = jnp.einsum('enc,end->ncd', centered, centered) / (ensemble_nets - 1)
    alea = jnp.stack(varss).mean(axis=0)
    return states + m_bar, epi, alea


if __name__ == "__main__":
    # Small shapes consistent with the module's forward.
    ensemble_nets = 3
    state_dim = 4
    mu_dim = 8
    action_dim = 4
    hidden_dims = [32, 32]
    n = 16
    state_space = (0.0, 1.0)
    action_space = (-1.0, 1.0)

    key = jax.random.PRNGKey(0)
    key, kp, ks, km, ka = jax.random.split(key, 5)

    params = init_params(kp, ensemble_nets, state_dim, mu_dim, action_dim, hidden_dims)

    states = jax.random.uniform(ks, (n, state_dim), jnp.float32,
                                state_space[0], state_space[1])
    mu = jax.nn.softmax(jax.random.normal(km, (mu_dim,), jnp.float32))
    actions = jax.random.uniform(ka, (n, action_dim), jnp.float32,
                                 action_space[0], action_space[1])

    # f32 matmul operands here for a tight numerical check; pass
    # compute_dtype=jnp.bfloat16 on v6e/v7x for the fast MXU path with f32
    # accumulation (keep f32 on v5e).
    next_states, epi, alea = unknown_dynamics_forward(
        states, mu, actions, params,
        ensemble_nets=ensemble_nets, state_dim=state_dim,
        state_space=state_space, action_space=action_space,
        compute_dtype=jnp.float32)
    jax.block_until_ready((next_states, epi, alea))

    ref_next, ref_epi, ref_alea = reference_forward(
        states, mu, actions, params,
        ensemble_nets=ensemble_nets,
        state_space=state_space, action_space=action_space)

    assert jnp.allclose(next_states, ref_next, atol=1e-5, rtol=1e-5)
    assert jnp.allclose(epi, ref_epi, atol=1e-5, rtol=1e-5)
    assert jnp.allclose(alea, ref_alea, atol=1e-5, rtol=1e-5)

    print("KERNEL_OK")
</pallas_src>

<mosaic_0001>
module attributes {stable_mosaic.version = 11 : i64} {
  func.func @_ensemble_kernel(%arg0: i32, %arg1: memref<8x4xf32, #tpu.memory_space<vmem>>, %arg2: memref<8x4xf32, #tpu.memory_space<vmem>>, %arg3: memref<1x8xf32, #tpu.memory_space<vmem>>, %arg4: memref<16x96xf32, #tpu.memory_space<vmem>>, %arg5: memref<1x96xf32, #tpu.memory_space<vmem>>, %arg6: memref<96x96xf32, #tpu.memory_space<vmem>>, %arg7: memref<1x96xf32, #tpu.memory_space<vmem>>, %arg8: memref<96x24xf32, #tpu.memory_space<vmem>>, %arg9: memref<1x24xf32, #tpu.memory_space<vmem>>, %arg10: memref<1x12xf32, #tpu.memory_space<vmem>>, %arg11: memref<1x12xf32, #tpu.memory_space<vmem>>, %arg12: memref<12x48xf32, #tpu.memory_space<vmem>>, %arg13: memref<12x48xf32, #tpu.memory_space<vmem>>, %arg14: memref<8x128xf32, #tpu.memory_space<vmem>>) attributes {dimension_semantics = [#tpu.dimension_semantics<parallel>], iteration_bounds = array<i64: 2>, scalar_prefetch = 0 : i64, scratch_operands = 0 : i64, tpu.core_type = #tpu.core_type<tc>, window_params = [{transform_indices = @transform_0, window_bounds = array<i64: 8, 4>}, {transform_indices = @transform_1, window_bounds = array<i64: 8, 4>}, {pipeline_mode = #tpu.pipeline_mode<synchronous>, transform_indices = @transform_2, window_bounds = array<i64: 1, 8>}, {pipeline_mode = #tpu.pipeline_mode<synchronous>, transform_indices = @transform_3, window_bounds = array<i64: 16, 96>}, {pipeline_mode = #tpu.pipeline_mode<synchronous>, transform_indices = @transform_4, window_bounds = array<i64: 1, 96>}, {pipeline_mode = #tpu.pipeline_mode<synchronous>, transform_indices = @transform_5, window_bounds = array<i64: 96, 96>}, {pipeline_mode = #tpu.pipeline_mode<synchronous>, transform_indices = @transform_6, window_bounds = array<i64: 1, 96>}, {pipeline_mode = #tpu.pipeline_mode<synchronous>, transform_indices = @transform_7, window_bounds = array<i64: 96, 24>}, {pipeline_mode = #tpu.pipeline_mode<synchronous>, transform_indices = @transform_8, window_bounds = array<i64: 1, 24>}, {pipeline_mode = #tpu.pipeline_mode<synchronous>, transform_indices = @transform_9, window_bounds = array<i64: 1, 12>}, {pipeline_mode = #tpu.pipeline_mode<synchronous>, transform_indices = @transform_10, window_bounds = array<i64: 1, 12>}, {pipeline_mode = #tpu.pipeline_mode<synchronous>, transform_indices = @transform_11, window_bounds = array<i64: 12, 48>}, {pipeline_mode = #tpu.pipeline_mode<synchronous>, transform_indices = @transform_12, window_bounds = array<i64: 12, 48>}, {transform_indices = @transform_13, window_bounds = array<i64: 8, 128>}]} {
    %c0 = arith.constant 0 : index
    %c0_0 = arith.constant 0 : index
    %0 = vector.load %arg1[%c0, %c0_0] : memref<8x4xf32, #tpu.memory_space<vmem>>, vector<8x4xf32>
    %cst = arith.constant 0.000000e+00 : f32
    %1 = vector.broadcast %cst : f32 to vector<8x4xf32>
    %2 = arith.subf %0, %1 : vector<8x4xf32>
    %cst_1 = arith.constant 2.000000e+00 : f32
    %3 = vector.broadcast %cst_1 : f32 to vector<8x4xf32>
    %4 = arith.mulf %3, %2 : vector<8x4xf32>
    %cst_2 = arith.constant 1.000000e+00 : f32
    %5 = vector.broadcast %cst_2 : f32 to vector<8x4xf32>
    %6 = arith.divf %4, %5 : vector<8x4xf32>
    %cst_3 = arith.constant 1.000000e+00 : f32
    %7 = vector.broadcast %cst_3 : f32 to vector<8x4xf32>
    %8 = arith.subf %6, %7 : vector<8x4xf32>
    %c0_4 = arith.constant 0 : index
    %c0_5 = arith.constant 0 : index
    %9 = vector.load %arg2[%c0_4, %c0_5] : memref<8x4xf32, #tpu.memory_space<vmem>>, vector<8x4xf32>
    %cst_6 = arith.constant -1.000000e+00 : f32
    %10 = vector.broadcast %cst_6 : f32 to vector<8x4xf32>
    %11 = arith.subf %9, %10 : vector<8x4xf32>
    %cst_7 = arith.constant 2.000000e+00 : f32
    %12 = vector.broadcast %cst_7 : f32 to vector<8x4xf32>
    %13 = arith.mulf %12, %11 : vector<8x4xf32>
    %cst_8 = arith.constant 2.000000e+00 : f32
    %14 = vector.broadcast %cst_8 : f32 to vector<8x4xf32>
    %15 = arith.divf %13, %14 : vector<8x4xf32>
    %cst_9 = arith.constant 1.000000e+00 : f32
    %16 = vector.broadcast %cst_9 : f32 to vector<8x4xf32>
    %17 = arith.subf %15, %16 : vector<8x4xf32>
    %c0_10 = arith.constant 0 : index
    %c0_11 = arith.constant 0 : index
    %18 = vector.load %arg3[%c0_10, %c0_11] : memref<1x8xf32, #tpu.memory_space<vmem>>, vector<1x8xf32>
    %19 = vector.shape_cast %18 : vector<1x8xf32> to vector<1x8xf32>
    %20 = vector.broadcast %19 : vector<1x8xf32> to vector<8x8xf32>
    %21 = tpu.concatenate %8, %20, %17 in 1 : vector<8x4xf32>, vector<8x8xf32>, vector<8x4xf32> -> vector<8x16xf32>
    %c0_12 = arith.constant 0 : index
    %c0_13 = arith.constant 0 : index
    %22 = vector.load %arg4[%c0_12, %c0_13] : memref<16x96xf32, #tpu.memory_space<vmem>>, vector<16x96xf32>
    %cst_14 = arith.constant dense<0.000000e+00> : vector<8x96xf32>
    %23 = tpu.matmul %21, %22, %cst_14 {dimension_numbers = #tpu.dot_dimension_numbers<[1], [0], [0], [1], [0, 0, 1, 1], [], []>} : vector<8x16xf32>, vector<16x96xf32>, vector<8x96xf32> -> vector<8x96xf32>
    %c0_15 = arith.constant 0 : index
    %c0_16 = arith.constant 0 : index
    %24 = vector.load %arg5[%c0_15, %c0_16] : memref<1x96xf32, #tpu.memory_space<vmem>>, vector<1x96xf32>
    %25 = vector.broadcast %24 : vector<1x96xf32> to vector<8x96xf32>
    %26 = arith.addf %23, %25 : vector<8x96xf32>
    %cst_17 = arith.constant 0.000000e+00 : f32
    %27 = vector.broadcast %cst_17 : f32 to vector<8x96xf32>
    %28 = arith.cmpf ogt, %26, %27 : vector<8x96xf32>
    %cst_18 = arith.constant 0.00999999977 : f32
    %29 = vector.broadcast %cst_18 : f32 to vector<8x96xf32>
    %30 = arith.mulf %29, %26 : vector<8x96xf32>
    %31 = arith.select %28, %26, %30 : vector<8x96xi1>, vector<8x96xf32>
    %c0_19 = arith.constant 0 : index
    %c0_20 = arith.constant 0 : index
    %32 = vector.load %arg6[%c0_19, %c0_20] : memref<96x96xf32, #tpu.memory_space<vmem>>, vector<96x96xf32>
    %cst_21 = arith.constant dense<0.000000e+00> : vector<8x96xf32>
    %33 = tpu.matmul %31, %32, %cst_21 {dimension_numbers = #tpu.dot_dimension_numbers<[1], [0], [0], [1], [0, 0, 1, 1], [], []>} : vector<8x96xf32>, vector<96x96xf32>, vector<8x96xf32> -> vector<8x96xf32>
    %c0_22 = arith.constant 0 : index
    %c0_23 = arith.constant 0 : index
    %34 = vector.load %arg7[%c0_22, %c0_23] : memref<1x96xf32, #tpu.memory_space<vmem>>, vector<1x96xf32>
    %35 = vector.broadcast %34 : vector<1x96xf32> to vector<8x96xf32>
    %36 = arith.addf %33, %35 : vector<8x96xf32>
    %cst_24 = arith.constant 0.000000e+00 : f32
    %37 = vector.broadcast %cst_24 : f32 to vector<8x96xf32>
    %38 = arith.cmpf ogt, %36, %37 : vector<8x96xf32>
    %cst_25 = arith.constant 0.00999999977 : f32
    %39 = vector.broadcast %cst_25 : f32 to vector<8x96xf32>
    %40 = arith.mulf %39, %36 : vector<8x96xf32>
    %41 = arith.select %38, %36, %40 : vector<8x96xi1>, vector<8x96xf32>
    %c0_26 = arith.constant 0 : index
    %c0_27 = arith.constant 0 : index
    %42 = vector.load %arg8[%c0_26, %c0_27] : memref<96x24xf32, #tpu.memory_space<vmem>>, vector<96x24xf32>
    %cst_28 = arith.constant dense<0.000000e+00> : vector<8x24xf32>
    %43 = tpu.matmul %41, %42, %cst_28 {dimension_numbers = #tpu.dot_dimension_numbers<[1], [0], [0], [1], [0, 0, 1, 1], [], []>} : vector<8x96xf32>, vector<96x24xf32>, vector<8x24xf32> -> vector<8x24xf32>
    %c0_29 = arith.constant 0 : index
    %c0_30 = arith.constant 0 : index
    %44 = vector.load %arg9[%c0_29, %c0_30] : memref<1x24xf32, #tpu.memory_space<vmem>>, vector<1x24xf32>
    %45 = vector.broadcast %44 : vector<1x24xf32> to vector<8x24xf32>
    %46 = arith.addf %43, %45 : vector<8x24xf32>
    %47 = vector.extract_strided_slice %46 {offsets = [0, 0], sizes = [8, 12], strides = [1, 1]} : vector<8x24xf32> to vector<8x12xf32>
    %48 = vector.extract_strided_slice %46 {offsets = [0, 12], sizes = [8, 12], strides = [1, 1]} : vector<8x24xf32> to vector<8x12xf32>
    %c0_31 = arith.constant 0 : index
    %c0_32 = arith.constant 0 : index
    %49 = vector.load %arg10[%c0_31, %c0_32] : memref<1x12xf32, #tpu.memory_space<vmem>>, vector<1x12xf32>
    %c0_33 = arith.constant 0 : index
    %c0_34 = arith.constant 0 : index
    %50 = vector.load %arg10[%c0_33, %c0_34] : memref<1x12xf32, #tpu.memory_space<vmem>>, vector<1x12xf32>
    %51 = vector.broadcast %50 : vector<1x12xf32> to vector<8x12xf32>
    %52 = arith.subf %51, %48 : vector<8x12xf32>
    %cst_35 = arith.constant 0.000000e+00 : f32
    %53 = vector.broadcast %cst_35 : f32 to vector<8x12xf32>
    %54 = arith.maximumf %52, %53 : vector<8x12xf32>
    %55 = math.absf %52 : vector<8x12xf32>
    %cst_36 = arith.constant 0.000000e+00 : f32
    %56 = vector.broadcast %cst_36 : f32 to vector<8x12xf32>
    %57 = arith.subf %56, %55 : vector<8x12xf32>
    %58 = math.exp %57 : vector<8x12xf32>
    %cst_37 = arith.constant 1.000000e+00 : f32
    %59 = vector.broadcast %cst_37 : f32 to vector<8x12xf32>
    %60 = arith.addf %59, %58 : vector<8x12xf32>
    %61 = math.log %60 : vector<8x12xf32>
    %62 = arith.addf %54, %61 : vector<8x12xf32>
    %63 = vector.broadcast %49 : vector<1x12xf32> to vector<8x12xf32>
    %64 = arith.subf %63, %62 : vector<8x12xf32>
    %c0_38 = arith.constant 0 : index
    %c0_39 = arith.constant 0 : index
    %65 = vector.load %arg11[%c0_38, %c0_39] : memref<1x12xf32, #tpu.memory_space<vmem>>, vector<1x12xf32>
    %c0_40 = arith.constant 0 : index
    %c0_41 = arith.constant 0 : index
    %66 = vector.load %arg11[%c0_40, %c0_41] : memref<1x12xf32, #tpu.memory_space<vmem>>, vector<1x12xf32>
    %67 = vector.broadcast %66 : vector<1x12xf32> to vector<8x12xf32>
    %68 = arith.subf %64, %67 : vector<8x12xf32>
    %cst_42 = arith.constant 0.000000e+00 : f32
    %69 = vector.broadcast %cst_42 : f32 to vector<8x12xf32>
    %70 = arith.maximumf %68, %69 : vector<8x12xf32>
    %71 = math.absf %68 : vector<8x12xf32>
    %cst_43 = arith.constant 0.000000e+00 : f32
    %72 = vector.broadcast %cst_43 : f32 to vector<8x12xf32>
    %73 = arith.subf %72, %71 : vector<8x12xf32>
    %74 = math.exp %73 : vector<8x12xf32>
    %cst_44 = arith.constant 1.000000e+00 : f32
    %75 = vector.broadcast %cst_44 : f32 to vector<8x12xf32>
    %76 = arith.addf %75, %74 : vector<8x12xf32>
    %77 = math.log %76 : vector<8x12xf32>
    %78 = arith.addf %70, %77 : vector<8x12xf32>
    %79 = vector.broadcast %65 : vector<1x12xf32> to vector<8x12xf32>
    %80 = arith.addf %79, %78 : vector<8x12xf32>
    %81 = math.exp %80 : vector<8x12xf32>
    %82 = vector.extract_strided_slice %47 {offsets = [0, 0], sizes = [8, 4], strides = [1, 1]} : vector<8x12xf32> to vector<8x4xf32>
    %83 = vector.extract_strided_slice %81 {offsets = [0, 0], sizes = [8, 4], strides = [1, 1]} : vector<8x12xf32> to vector<8x4xf32>
    %84 = vector.extract_strided_slice %47 {offsets = [0, 4], sizes = [8, 4], strides = [1, 1]} : vector<8x12xf32> to vector<8x4xf32>
    %85 = arith.addf %82, %84 : vector<8x4xf32>
    %86 = vector.extract_strided_slice %81 {offsets = [0, 4], sizes = [8, 4], strides = [1, 1]} : vector<8x12xf32> to vector<8x4xf32>
    %87 = arith.addf %83, %86 : vector<8x4xf32>
    %88 = vector.extract_strided_slice %47 {offsets = [0, 8], sizes = [8, 4], strides = [1, 1]} : vector<8x12xf32> to vector<8x4xf32>
    %89 = arith.addf %85, %88 : vector<8x4xf32>
    %90 = vector.extract_strided_slice %81 {offsets = [0, 8], sizes = [8, 4], strides = [1, 1]} : vector<8x12xf32> to vector<8x4xf32>
    %91 = arith.addf %87, %90 : vector<8x4xf32>
    %cst_45 = arith.constant 0.333333343 : f32
    %92 = vector.broadcast %cst_45 : f32 to vector<8x4xf32>
    %93 = arith.mulf %89, %92 : vector<8x4xf32>
    %cst_46 = arith.constant 0.333333343 : f32
    %94 = vector.broadcast %cst_46 : f32 to vector<8x4xf32>
    %95 = arith.mulf %91, %94 : vector<8x4xf32>
    %96 = tpu.concatenate %93, %93, %93 in 1 : vector<8x4xf32>, vector<8x4xf32>, vector<8x4xf32> -> vector<8x12xf32>
    %97 = arith.subf %47, %96 : vector<8x12xf32>
    %c0_47 = arith.constant 0 : index
    %c0_48 = arith.constant 0 : index
    %98 = vector.load %arg12[%c0_47, %c0_48] : memref<12x48xf32, #tpu.memory_space<vmem>>, vector<12x48xf32>
    %cst_49 = arith.constant dense<0.000000e+00> : vector<8x48xf32>
    %99 = tpu.matmul %97, %98, %cst_49 {dimension_numbers = #tpu.dot_dimension_numbers<[1], [0], [0], [1], [0, 0, 1, 1], [], []>} : vector<8x12xf32>, vector<12x48xf32>, vector<8x48xf32> -> vector<8x48xf32>
    %c0_50 = arith.constant 0 : index
    %c0_51 = arith.constant 0 : index
    %100 = vector.load %arg13[%c0_50, %c0_51] : memref<12x48xf32, #tpu.memory_space<vmem>>, vector<12x48xf32>
    %cst_52 = arith.constant dense<0.000000e+00> : vector<8x48xf32>
    %101 = tpu.matmul %97, %100, %cst_52 {dimension_numbers = #tpu.dot_dimension_numbers<[1], [0], [0], [1], [0, 0, 1, 1], [], []>} : vector<8x12xf32>, vector<12x48xf32>, vector<8x48xf32> -> vector<8x48xf32>
    %102 = arith.mulf %99, %101 : vector<8x48xf32>
    %103 = vector.extract_strided_slice %102 {offsets = [0, 0], sizes = [8, 16], strides = [1, 1]} : vector<8x48xf32> to vector<8x16xf32>
    %104 = vector.extract_strided_slice %102 {offsets = [0, 16], sizes = [8, 16], strides = [1, 1]} : vector<8x48xf32> to vector<8x16xf32>
    %105 = arith.addf %103, %104 : vector<8x16xf32>
    %106 = vector.extract_strided_slice %102 {offsets = [0, 32], sizes = [8, 16], strides = [1, 1]} : vector<8x48xf32> to vector<8x16xf32>
    %107 = arith.addf %105, %106 : vector<8x16xf32>
    %cst_53 = arith.constant 5.000000e-01 : f32
    %108 = vector.broadcast %cst_53 : f32 to vector<8x16xf32>
    %109 = arith.mulf %107, %108 : vector<8x16xf32>
    %110 = tpu.concatenate %93, %95, %109 in 1 : vector<8x4xf32>, vector<8x4xf32>, vector<8x16xf32> -> vector<8x24xf32>
    %cst_54 = arith.constant 0.000000e+00 : f32
    %111 = vector.broadcast %cst_54 : f32 to vector<8x104xf32>
    %112 = tpu.concatenate %110, %111 in 1 : vector<8x24xf32>, vector<8x104xf32> -> vector<8x128xf32>
    %c0_55 = arith.constant 0 : index
    %c0_56 = arith.constant 0 : index
    %113 = vector.load %arg14[%c0_55, %c0_56] : memref<8x128xf32, #tpu.memory_space<vmem>>, vector<8x128xf32>
    tpu.vector_store %arg14[%c0_55, %c0_56], %112 {strides = array<i32>} : memref<8x128xf32, #tpu.memory_space<vmem>>, vector<8x128xf32>,
    return
  }
  func.func @transform_0(%arg0: i32) -> (i32, i32) {
    %c0_i32 = arith.constant 0 : i32
    %c0_i32_0 = arith.constant 0 : i32
    return %arg0, %c0_i32 : i32, i32
  }
  func.func @transform_1(%arg0: i32) -> (i32, i32) {
    %c0_i32 = arith.constant 0 : i32
    %c0_i32_0 = arith.constant 0 : i32
    return %arg0, %c0_i32 : i32, i32
  }
  func.func @transform_2(%arg0: i32) -> (i32, i32) {
    %c0_i32 = arith.constant 0 : i32
    %c0_i32_0 = arith.constant 0 : i32
    %c0_i32_1 = arith.constant 0 : i32
    return %c0_i32, %c0_i32_0 : i32, i32
  }
  func.func @transform_3(%arg0: i32) -> (i32, i32) {
    %c0_i32 = arith.constant 0 : i32
    %c0_i32_0 = arith.constant 0 : i32
    %c0_i32_1 = arith.constant 0 : i32
    return %c0_i32, %c0_i32_0 : i32, i32
  }
  func.func @transform_4(%arg0: i32) -> (i32, i32) {
    %c0_i32 = arith.constant 0 : i32
    %c0_i32_0 = arith.constant 0 : i32
    %c0_i32_1 = arith.constant 0 : i32
    return %c0_i32, %c0_i32_0 : i32, i32
  }
  func.func @transform_5(%arg0: i32) -> (i32, i32) {
    %c0_i32 = arith.constant 0 : i32
    %c0_i32_0 = arith.constant 0 : i32
    %c0_i32_1 = arith.constant 0 : i32
    return %c0_i32, %c0_i32_0 : i32, i32
  }
  func.func @transform_6(%arg0: i32) -> (i32, i32) {
    %c0_i32 = arith.constant 0 : i32
    %c0_i32_0 = arith.constant 0 : i32
    %c0_i32_1 = arith.constant 0 : i32
    return %c0_i32, %c0_i32_0 : i32, i32
  }
  func.func @transform_7(%arg0: i32) -> (i32, i32) {
    %c0_i32 = arith.constant 0 : i32
    %c0_i32_0 = arith.constant 0 : i32
    %c0_i32_1 = arith.constant 0 : i32
    return %c0_i32, %c0_i32_0 : i32, i32
  }
  func.func @transform_8(%arg0: i32) -> (i32, i32) {
    %c0_i32 = arith.constant 0 : i32
    %c0_i32_0 = arith.constant 0 : i32
    %c0_i32_1 = arith.constant 0 : i32
    return %c0_i32, %c0_i32_0 : i32, i32
  }
  func.func @transform_9(%arg0: i32) -> (i32, i32) {
    %c0_i32 = arith.constant 0 : i32
    %c0_i32_0 = arith.constant 0 : i32
    %c0_i32_1 = arith.constant 0 : i32
    return %c0_i32, %c0_i32_0 : i32, i32
  }
  func.func @transform_10(%arg0: i32) -> (i32, i32) {
    %c0_i32 = arith.constant 0 : i32
    %c0_i32_0 = arith.constant 0 : i32
    %c0_i32_1 = arith.constant 0 : i32
    return %c0_i32, %c0_i32_0 : i32, i32
  }
  func.func @transform_11(%arg0: i32) -> (i32, i32) {
    %c0_i32 = arith.constant 0 : i32
    %c0_i32_0 = arith.constant 0 : i32
    %c0_i32_1 = arith.constant 0 : i32
    return %c0_i32, %c0_i32_0 : i32, i32
  }
  func.func @transform_12(%arg0: i32) -> (i32, i32) {
    %c0_i32 = arith.constant 0 : i32
    %c0_i32_0 = arith.constant 0 : i32
    %c0_i32_1 = arith.constant 0 : i32
    return %c0_i32, %c0_i32_0 : i32, i32
  }
  func.func @transform_13(%arg0: i32) -> (i32, i32) {
    %c0_i32 = arith.constant 0 : i32
    %c0_i32_0 = arith.constant 0 : i32
    return %arg0, %c0_i32 : i32, i32
  }
}

</mosaic_0001>

<llo_original>
// kernel: tpu_custom_call.1
$region0: #{tpu_custom_call.1}
  #allocation0 [shape = 'u32[]', space=smem, size = 0x4, offset = 0x4, fixed_abs, tag = 'smem constant byte address 0x4 - core index']
  #allocation1 [shape = 'u32[144,128]{1,0:T(1,128)}', space=vmem, size = 0x12000, scoped, tag = 'internal scratch']
  %s0 = inlined_call_operand.vmem [shape: f32[16,4], index: 0, kind: input, shape index: {}]
  %s1 = inlined_call_operand.vmem [shape: f32[16,4], index: 1, kind: input, shape index: {}]
  %s2 = inlined_call_operand.vmem [shape: f32[1,8], index: 2, kind: input, shape index: {}]
  %s3 = inlined_call_operand.vmem [shape: f32[16,96], index: 3, kind: input, shape index: {}]
  %s4 = inlined_call_operand.vmem [shape: f32[1,96], index: 4, kind: input, shape index: {}]
  %s5 = inlined_call_operand.vmem [shape: f32[96,96], index: 5, kind: input, shape index: {}]
  %s6 = inlined_call_operand.vmem [shape: f32[1,96], index: 6, kind: input, shape index: {}]
  %s7 = inlined_call_operand.vmem [shape: f32[96,24], index: 7, kind: input, shape index: {}]
  %s8 = inlined_call_operand.vmem [shape: f32[1,24], index: 8, kind: input, shape index: {}]
  %s9 = inlined_call_operand.vmem [shape: f32[1,12], index: 9, kind: input, shape index: {}]
  %s10 = inlined_call_operand.vmem [shape: f32[1,12], index: 10, kind: input, shape index: {}]
  %s11 = inlined_call_operand.vmem [shape: f32[12,48], index: 11, kind: input, shape index: {}]
  %s12 = inlined_call_operand.vmem [shape: f32[12,48], index: 12, kind: input, shape index: {}]
  %s13 = inlined_call_operand.hbm [shape: f32[16,128], index: 13, kind: output, shape index: {}]
  %s14 = sld [smem:[#allocation0]]
  $region85: #{tpu_custom_call.1} parent=0
    _
  %s16 = ssub.s32 1, %s14
  %s17 = scalar_select 0, %s16, %s14
  $region1: #{tpu_custom_call.1} parent=0
    #allocation2 [shape = 'u8[8192]{0}', space=vmem, size = 0x2000, scoped, tag = 'output window, operand 0']
    #allocation3 [shape = 's32[2]{0}', space=sflag, size = 0x8, scoped, tag = 'scoped memory for tpu_custom_call.1']
    %18 = vsyncpa [#allocation3], 0
    %s19 = scalar_lea.sflag [#allocation3], 1
    %20 = vsyncpa %s19, 0
    loop: start=0, step=1, limit=4
    $region2: #{tpu_custom_call.1} parent=1 // loop_pre_header
      _
    $region3: #{tpu_custom_call.1} parent=1 // loop_header
      %s22 = sphi 0, %s26
      %p23 = scmp.ge.s32.totalorder %s22, 4
      %s32 = sphi 0, %s34
      %s35 = sphi 0, %s32
      %s36 = sphi 0, %s35
      %s52 = sphi 0, %s36
      %s58 = sphi 0, %s60
      %s61 = sphi 0, %s58
      %s62 = sphi 0, %s61
      %s78 = sphi 0, %s62
      %s82 = sphi 0, %s82
      %s84 = sphi 0, %s82
      %s85 = sphi 0, %s84
      %s99 = sphi 0, %s85
      %s103 = sphi 0, %s103
      %s105 = sphi 0, %s103
      %s106 = sphi 0, %s105
      %s120 = sphi 0, %s106
      %s124 = sphi 0, %s124
      %s126 = sphi 0, %s124
      %s127 = sphi 0, %s126
      %s141 = sphi 0, %s127
      %s145 = sphi 0, %s145
      %s147 = sphi 0, %s145
      %s148 = sphi 0, %s147
      %s162 = sphi 0, %s148
      %s166 = sphi 0, %s166
      %s168 = sphi 0, %s166
      %s169 = sphi 0, %s168
      %s183 = sphi 0, %s169
      %s187 = sphi 0, %s187
      %s189 = sphi 0, %s187
      %s190 = sphi 0, %s189
      %s204 = sphi 0, %s190
      %s208 = sphi 0, %s208
      %s210 = sphi 0, %s208
      %s211 = sphi 0, %s210
      %s225 = sphi 0, %s211
      %s229 = sphi 0, %s229
      %s231 = sphi 0, %s229
      %s232 = sphi 0, %s231
      %s246 = sphi 0, %s232
      %s250 = sphi 0, %s250
      %s252 = sphi 0, %s250
      %s253 = sphi 0, %s252
      %s267 = sphi 0, %s253
      %s271 = sphi 0, %s271
      %s273 = sphi 0, %s271
      %s274 = sphi 0, %s273
      %s288 = sphi 0, %s274
      %s292 = sphi 0, %s292
      %s294 = sphi 0, %s292
      %s295 = sphi 0, %s294
      %s309 = sphi 0, %s295
      %s315 = sphi 0, %s317
      %s318 = sphi 0, %s315
      %s319 = sphi 0, %s318
      %s335 = sphi 0, %s319
    $region4: #{tpu_custom_call.1} parent=1 // loop_header_branch
      %25 = sbr.rel (%p23) target = $region8
    $region5: #{tpu_custom_call.1} parent=1 // loop_body
      %s27 = ssub.s32 %s22, 1
      %s28 = ssub.s32 %s22, 2
      %s29 = sadd.s32 %s22, 1
      %s30 = ssub.s32 %s22, %s29
      %p31 = scmp.eq.s32.totalorder %s30, 0
      %s33 = sadd.s32 %s32, 1
      %s34 = scalar_select %p31, %s32, %s33
      %p37 = pneg %p31
      %p38 = scmp.eq.s32.totalorder %s22, 1
      %p39 = por %p37, %p38
      %p40 = scmp.ne.s32.totalorder %s32, %s35
      %p41 = scmp.eq.s32.totalorder %s22, 0
      %p42 = por %p40, %p41
      %p43 = scmp.ne.s32.totalorder %s32, %s35
      %p44 = scmp.eq.s32.totalorder %s27, 1
      %p45 = por %p43, %p44
      %p46 = scmp.ne.s32.totalorder %s35, %s36
      %p47 = scmp.eq.s32.totalorder %s27, 0
      %p48 = por %p46, %p47
      %p49 = scmp.ne.s32.totalorder %s35, %s36
      %p50 = scmp.eq.s32.totalorder %s28, 1
      %p51 = por %p49, %p50
      %p53 = scmp.ne.s32.totalorder %s36, %s52
      %p54 = scmp.eq.s32.totalorder %s28, 0
      %p55 = por %p53, %p54
      %s56 = ssub.s32 %s22, %s29
      %p57 = scmp.eq.s32.totalorder %s56, 0
      %s59 = sadd.s32 %s58, 1
      %s60 = scalar_select %p57, %s58, %s59
      %p63 = pneg %p57
      %p64 = scmp.eq.s32.totalorder %s22, 1
      %p65 = por %p63, %p64
      %p66 = scmp.ne.s32.totalorder %s58, %s61
      %p67 = scmp.eq.s32.totalorder %s22, 0
      %p68 = por %p66, %p67
      %p69 = scmp.ne.s32.totalorder %s58, %s61
      %p70 = scmp.eq.s32.totalorder %s27, 1
      %p71 = por %p69, %p70
      %p72 = scmp.ne.s32.totalorder %s61, %s62
      %p73 = scmp.eq.s32.totalorder %s27, 0
      %p74 = por %p72, %p73
      %p75 = scmp.ne.s32.totalorder %s61, %s62
      %p76 = scmp.eq.s32.totalorder %s28, 1
      %p77 = por %p75, %p76
      %p79 = scmp.ne.s32.totalorder %s62, %s78
      %p80 = scmp.eq.s32.totalorder %s28, 0
      %p81 = por %p79, %p80
      %s83 = sadd.s32 %s82, 1
      %p86 = scmp.eq.s32.totalorder %s22, 1
      %p87 = scmp.ne.s32.totalorder %s82, %s84
      %p88 = scmp.eq.s32.totalorder %s22, 0
      %p89 = por %p87, %p88
      %p90 = scmp.ne.s32.totalorder %s82, %s84
      %p91 = scmp.eq.s32.totalorder %s27, 1
      %p92 = por %p90, %p91
      %p93 = scmp.ne.s32.totalorder %s84, %s85
      %p94 = scmp.eq.s32.totalorder %s27, 0
      %p95 = por %p93, %p94
      %p96 = scmp.ne.s32.totalorder %s84, %s85
      %p97 = scmp.eq.s32.totalorder %s28, 1
      %p98 = por %p96, %p97
      %p100 = scmp.ne.s32.totalorder %s85, %s99
      %p101 = scmp.eq.s32.totalorder %s28, 0
      %p102 = por %p100, %p101
      %s104 = sadd.s32 %s103, 1
      %p107 = scmp.eq.s32.totalorder %s22, 1
      %p108 = scmp.ne.s32.totalorder %s103, %s105
      %p109 = scmp.eq.s32.totalorder %s22, 0
      %p110 = por %p108, %p109
      %p111 = scmp.ne.s32.totalorder %s103, %s105
      %p112 = scmp.eq.s32.totalorder %s27, 1
      %p113 = por %p111, %p112
      %p114 = scmp.ne.s32.totalorder %s105, %s106
      %p115 = scmp.eq.s32.totalorder %s27, 0
      %p116 = por %p114, %p115
      %p117 = scmp.ne.s32.totalorder %s105, %s106
      %p118 = scmp.eq.s32.totalorder %s28, 1
      %p119 = por %p117, %p118
      %p121 = scmp.ne.s32.totalorder %s106, %s120
      %p122 = scmp.eq.s32.totalorder %s28, 0
      %p123 = por %p121, %p122
      %s125 = sadd.s32 %s124, 1
      %p128 = scmp.eq.s32.totalorder %s22, 1
      %p129 = scmp.ne.s32.totalorder %s124, %s126
      %p130 = scmp.eq.s32.totalorder %s22, 0
      %p131 = por %p129, %p130
      %p132 = scmp.ne.s32.totalorder %s124, %s126
      %p133 = scmp.eq.s32.totalorder %s27, 1
      %p134 = por %p132, %p133
      %p135 = scmp.ne.s32.totalorder %s126, %s127
      %p136 = scmp.eq.s32.totalorder %s27, 0
      %p137 = por %p135, %p136
      %p138 = scmp.ne.s32.totalorder %s126, %s127
      %p139 = scmp.eq.s32.totalorder %s28, 1
      %p140 = por %p138, %p139
      %p142 = scmp.ne.s32.totalorder %s127, %s141
      %p143 = scmp.eq.s32.totalorder %s28, 0
      %p144 = por %p142, %p143
      %s146 = sadd.s32 %s145, 1
      %p149 = scmp.eq.s32.totalorder %s22, 1
      %p150 = scmp.ne.s32.totalorder %s145, %s147
      %p151 = scmp.eq.s32.totalorder %s22, 0
      %p152 = por %p150, %p151
      %p153 = scmp.ne.s32.totalorder %s145, %s147
      %p154 = scmp.eq.s32.totalorder %s27, 1
      %p155 = por %p153, %p154
      %p156 = scmp.ne.s32.totalorder %s147, %s148
      %p157 = scmp.eq.s32.totalorder %s27, 0
      %p158 = por %p156, %p157
      %p159 = scmp.ne.s32.totalorder %s147, %s148
      %p160 = scmp.eq.s32.totalorder %s28, 1
      %p161 = por %p159, %p160
      %p163 = scmp.ne.s32.totalorder %s148, %s162
      %p164 = scmp.eq.s32.totalorder %s28, 0
      %p165 = por %p163, %p164
      %s167 = sadd.s32 %s166, 1
      %p170 = scmp.eq.s32.totalorder %s22, 1
      %p171 = scmp.ne.s32.totalorder %s166, %s168
      %p172 = scmp.eq.s32.totalorder %s22, 0
      %p173 = por %p171, %p172
      %p174 = scmp.ne.s32.totalorder %s166, %s168
      %p175 = scmp.eq.s32.totalorder %s27, 1
      %p176 = por %p174, %p175
      %p177 = scmp.ne.s32.totalorder %s168, %s169
      %p178 = scmp.eq.s32.totalorder %s27, 0
      %p179 = por %p177, %p178
      %p180 = scmp.ne.s32.totalorder %s168, %s169
      %p181 = scmp.eq.s32.totalorder %s28, 1
      %p182 = por %p180, %p181
      %p184 = scmp.ne.s32.totalorder %s169, %s183
      %p185 = scmp.eq.s32.totalorder %s28, 0
      %p186 = por %p184, %p185
      %s188 = sadd.s32 %s187, 1
      %p191 = scmp.eq.s32.totalorder %s22, 1
      %p192 = scmp.ne.s32.totalorder %s187, %s189
      %p193 = scmp.eq.s32.totalorder %s22, 0
      %p194 = por %p192, %p193
      %p195 = scmp.ne.s32.totalorder %s187, %s189
      %p196 = scmp.eq.s32.totalorder %s27, 1
      %p197 = por %p195, %p196
      %p198 = scmp.ne.s32.totalorder %s189, %s190
      %p199 = scmp.eq.s32.totalorder %s27, 0
      %p200 = por %p198, %p199
      %p201 = scmp.ne.s32.totalorder %s189, %s190
      %p202 = scmp.eq.s32.totalorder %s28, 1
      %p203 = por %p201, %p202
      %p205 = scmp.ne.s32.totalorder %s190, %s204
      %p206 = scmp.eq.s32.totalorder %s28, 0
      %p207 = por %p205, %p206
      %s209 = sadd.s32 %s208, 1
      %p212 = scmp.eq.s32.totalorder %s22, 1
      %p213 = scmp.ne.s32.totalorder %s208, %s210
      %p214 = scmp.eq.s32.totalorder %s22, 0
      %p215 = por %p213, %p214
      %p216 = scmp.ne.s32.totalorder %s208, %s210
      %p217 = scmp.eq.s32.totalorder %s27, 1
      %p218 = por %p216, %p217
      %p219 = scmp.ne.s32.totalorder %s210, %s211
      %p220 = scmp.eq.s32.totalorder %s27, 0
      %p221 = por %p219, %p220
      %p222 = scmp.ne.s32.totalorder %s210, %s211
      %p223 = scmp.eq.s32.totalorder %s28, 1
      %p224 = por %p222, %p223
      %p226 = scmp.ne.s32.totalorder %s211, %s225
      %p227 = scmp.eq.s32.totalorder %s28, 0
      %p228 = por %p226, %p227
      %s230 = sadd.s32 %s229, 1
      %p233 = scmp.eq.s32.totalorder %s22, 1
      %p234 = scmp.ne.s32.totalorder %s229, %s231
      %p235 = scmp.eq.s32.totalorder %s22, 0
      %p236 = por %p234, %p235
      %p237 = scmp.ne.s32.totalorder %s229, %s231
      %p238 = scmp.eq.s32.totalorder %s27, 1
      %p239 = por %p237, %p238
      %p240 = scmp.ne.s32.totalorder %s231, %s232
      %p241 = scmp.eq.s32.totalorder %s27, 0
      %p242 = por %p240, %p241
      %p243 = scmp.ne.s32.totalorder %s231, %s232
      %p244 = scmp.eq.s32.totalorder %s28, 1
      %p245 = por %p243, %p244
      %p247 = scmp.ne.s32.totalorder %s232, %s246
      %p248 = scmp.eq.s32.totalorder %s28, 0
      %p249 = por %p247, %p248
      %s251 = sadd.s32 %s250, 1
      %p254 = scmp.eq.s32.totalorder %s22, 1
      %p255 = scmp.ne.s32.totalorder %s250, %s252
      %p256 = scmp.eq.s32.totalorder %s22, 0
      %p257 = por %p255, %p256
      %p258 = scmp.ne.s32.totalorder %s250, %s252
      %p259 = scmp.eq.s32.totalorder %s27, 1
      %p260 = por %p258, %p259
      %p261 = scmp.ne.s32.totalorder %s252, %s253
      %p262 = scmp.eq.s32.totalorder %s27, 0
      %p263 = por %p261, %p262
      %p264 = scmp.ne.s32.totalorder %s252, %s253
      %p265 = scmp.eq.s32.totalorder %s28, 1
      %p266 = por %p264, %p265
      %p268 = scmp.ne.s32.totalorder %s253, %s267
      %p269 = scmp.eq.s32.totalorder %s28, 0
      %p270 = por %p268, %p269
      %s272 = sadd.s32 %s271, 1
      %p275 = scmp.eq.s32.totalorder %s22, 1
      %p276 = scmp.ne.s32.totalorder %s271, %s273
      %p277 = scmp.eq.s32.totalorder %s22, 0
      %p278 = por %p276, %p277
      %p279 = scmp.ne.s32.totalorder %s271, %s273
      %p280 = scmp.eq.s32.totalorder %s27, 1
      %p281 = por %p279, %p280
      %p282 = scmp.ne.s32.totalorder %s273, %s274
      %p283 = scmp.eq.s32.totalorder %s27, 0
      %p284 = por %p282, %p283
      %p285 = scmp.ne.s32.totalorder %s273, %s274
      %p286 = scmp.eq.s32.totalorder %s28, 1
      %p287 = por %p285, %p286
      %p289 = scmp.ne.s32.totalorder %s274, %s288
      %p290 = scmp.eq.s32.totalorder %s28, 0
      %p291 = por %p289, %p290
      %s293 = sadd.s32 %s292, 1
      %p296 = scmp.eq.s32.totalorder %s22, 1
      %p297 = scmp.ne.s32.totalorder %s292, %s294
      %p298 = scmp.eq.s32.totalorder %s22, 0
      %p299 = por %p297, %p298
      %p300 = scmp.ne.s32.totalorder %s292, %s294
      %p301 = scmp.eq.s32.totalorder %s27, 1
      %p302 = por %p300, %p301
      %p303 = scmp.ne.s32.totalorder %s294, %s295
      %p304 = scmp.eq.s32.totalorder %s27, 0
      %p305 = por %p303, %p304
      %p306 = scmp.ne.s32.totalorder %s294, %s295
      %p307 = scmp.eq.s32.totalorder %s28, 1
      %p308 = por %p306, %p307
      %p310 = scmp.ne.s32.totalorder %s295, %s309
      %p311 = scmp.eq.s32.totalorder %s28, 0
      %p312 = por %p310, %p311
      %s313 = ssub.s32 %s22, %s29
      %p314 = scmp.eq.s32.totalorder %s313, 0
      %s316 = sadd.s32 %s315, 1
      %s317 = scalar_select %p314, %s315, %s316
      %p320 = pneg %p314
      %p321 = scmp.eq.s32.totalorder %s22, 1
      %p322 = por %p320, %p321
      %p323 = scmp.ne.s32.totalorder %s315, %s318
      %p324 = scmp.eq.s32.totalorder %s22, 0
      %p325 = por %p323, %p324
      %p326 = scmp.ne.s32.totalorder %s315, %s318
      %p327 = scmp.eq.s32.totalorder %s27, 1
      %p328 = por %p326, %p327
      %p329 = scmp.ne.s32.totalorder %s318, %s319
      %p330 = scmp.eq.s32.totalorder %s27, 0
      %p331 = por %p329, %p330
      %p332 = scmp.ne.s32.totalorder %s318, %s319
      %p333 = scmp.eq.s32.totalorder %s28, 1
      %p334 = por %p332, %p333
      %p336 = scmp.ne.s32.totalorder %s319, %s335
      %p337 = scmp.eq.s32.totalorder %s28, 0
      %p338 = por %p336, %p337
      %p339 = scmp.le.s32.totalorder 1, %s22
      %p340 = scmp.lt.s32.totalorder %s22, 3
      %p341 = pnand %p339, %p340
      %p342 = pneg %p341
      // Predicated region
      $region9: #{tpu_custom_call.1} parent=5 // pred_check
        _
      $region10: #{tpu_custom_call.1} parent=5 // pred_check_branch
        %344 = sbr.rel (%p341) target = $region12
      $region11: #{tpu_custom_call.1} parent=5 // pred_region
        %s345 = ssub.s32 %s22, 1
        // Predicated region
        $region13: #{tpu_custom_call.1} parent=11 // pred_check
          %p346 = pneg %p95
        $region14: #{tpu_custom_call.1} parent=11 // pred_check_branch
          %348 = sbr.rel (%p346) target = $region16
        $region15: #{tpu_custom_call.1} parent=11 // pred_region
          _
        $region16: #{tpu_custom_call.1} parent=11 // pred_fallthru
          _
        // Predicated region
        $region17: #{tpu_custom_call.1} parent=11 // pred_check
          %p349 = pneg %p116
        $region18: #{tpu_custom_call.1} parent=11 // pred_check_branch
          %351 = sbr.rel (%p349) target = $region20
        $region19: #{tpu_custom_call.1} parent=11 // pred_region
          _
        $region20: #{tpu_custom_call.1} parent=11 // pred_fallthru
          _
        // Predicated region
        $region21: #{tpu_custom_call.1} parent=11 // pred_check
          %p352 = pneg %p137
        $region22: #{tpu_custom_call.1} parent=11 // pred_check_branch
          %354 = sbr.rel (%p352) target = $region24
        $region23: #{tpu_custom_call.1} parent=11 // pred_region
          _
        $region24: #{tpu_custom_call.1} parent=11 // pred_fallthru
          _
        // Predicated region
        $region25: #{tpu_custom_call.1} parent=11 // pred_check
          %p355 = pneg %p158
        $region26: #{tpu_custom_call.1} parent=11 // pred_check_branch
          %357 = sbr.rel (%p355) target = $region28
        $region27: #{tpu_custom_call.1} parent=11 // pred_region
          _
        $region28: #{tpu_custom_call.1} parent=11 // pred_fallthru
          _
        // Predicated region
        $region29: #{tpu_custom_call.1} parent=11 // pred_check
          %p358 = pneg %p179
        $region30: #{tpu_custom_call.1} parent=11 // pred_check_branch
          %360 = sbr.rel (%p358) target = $region32
        $region31: #{tpu_custom_call.1} parent=11 // pred_region
          _
        $region32: #{tpu_custom_call.1} parent=11 // pred_fallthru
          _
        // Predicated region
        $region33: #{tpu_custom_call.1} parent=11 // pred_check
          %p361 = pneg %p200
        $region34: #{tpu_custom_call.1} parent=11 // pred_check_branch
          %363 = sbr.rel (%p361) target = $region36
        $region35: #{tpu_custom_call.1} parent=11 // pred_region
          _
        $region36: #{tpu_custom_call.1} parent=11 // pred_fallthru
          _
        // Predicated region
        $region37: #{tpu_custom_call.1} parent=11 // pred_check
          %p364 = pneg %p221
        $region38: #{tpu_custom_call.1} parent=11 // pred_check_branch
          %366 = sbr.rel (%p364) target = $region40
        $region39: #{tpu_custom_call.1} parent=11 // pred_region
          _
        $region40: #{tpu_custom_call.1} parent=11 // pred_fallthru
          _
        // Predicated region
        $region41: #{tpu_custom_call.1} parent=11 // pred_check
          %p367 = pneg %p242
        $region42: #{tpu_custom_call.1} parent=11 // pred_check_branch
          %369 = sbr.rel (%p367) target = $region44
        $region43: #{tpu_custom_call.1} parent=11 // pred_region
          _
        $region44: #{tpu_custom_call.1} parent=11 // pred_fallthru
          _
        // Predicated region
        $region45: #{tpu_custom_call.1} parent=11 // pred_check
          %p370 = pneg %p263
        $region46: #{tpu_custom_call.1} parent=11 // pred_check_branch
          %372 = sbr.rel (%p370) target = $region48
        $region47: #{tpu_custom_call.1} parent=11 // pred_region
          _
        $region48: #{tpu_custom_call.1} parent=11 // pred_fallthru
          _
        // Predicated region
        $region49: #{tpu_custom_call.1} parent=11 // pred_check
          %p373 = pneg %p284
        $region50: #{tpu_custom_call.1} parent=11 // pred_check_branch
          %375 = sbr.rel (%p373) target = $region52
        $region51: #{tpu_custom_call.1} parent=11 // pred_region
          _
        $region52: #{tpu_custom_call.1} parent=11 // pred_fallthru
          _
        // Predicated region
        $region53: #{tpu_custom_call.1} parent=11 // pred_check
          %p376 = pneg %p305
        $region54: #{tpu_custom_call.1} parent=11 // pred_check_branch
          %378 = sbr.rel (%p376) target = $region56
        $region55: #{tpu_custom_call.1} parent=11 // pred_region
          _
        $region56: #{tpu_custom_call.1} parent=11 // pred_fallthru
          _
      $region12: #{tpu_custom_call.1} parent=5 // pred_fallthru
        _
      %p379 = scmp.lt.s32.totalorder %s22, 2
      // Predicated region
      $region57: #{tpu_custom_call.1} parent=5 // pred_check
        %p380 = pneg %p379
      $region58: #{tpu_custom_call.1} parent=5 // pred_check_branch
        %382 = sbr.rel (%p380) target = $region60
      $region59: #{tpu_custom_call.1} parent=5 // pred_region
        // Predicated region
        $region61: #{tpu_custom_call.1} parent=59 // pred_check
          %p383 = pneg %p42
        $region62: #{tpu_custom_call.1} parent=59 // pred_check_branch
          %385 = sbr.rel (%p383) target = $region64
        $region63: #{tpu_custom_call.1} parent=59 // pred_region
          %p386 = scmp.lt.s32.totalorder %s22, 1
          %s387 = scalar_select %p386, %s22, 1
          %s388 = smul.addr %s387, 8
          %s389 = scalar_lea.vmem %s0, %s388
        $region64: #{tpu_custom_call.1} parent=59 // pred_fallthru
          _
        // Predicated region
        $region65: #{tpu_custom_call.1} parent=59 // pred_check
          %p390 = pneg %p68
        $region66: #{tpu_custom_call.1} parent=59 // pred_check_branch
          %392 = sbr.rel (%p390) target = $region68
        $region67: #{tpu_custom_call.1} parent=59 // pred_region
          %p393 = scmp.lt.s32.totalorder %s22, 1
          %s394 = scalar_select %p393, %s22, 1
          %s395 = smul.addr %s394, 8
          %s396 = scalar_lea.vmem %s1, %s395
        $region68: #{tpu_custom_call.1} parent=59 // pred_fallthru
          _
      $region60: #{tpu_custom_call.1} parent=5 // pred_fallthru
        _
      %p397 = scmp.le.s32.totalorder 1, %s22
      %p398 = scmp.lt.s32.totalorder %s22, 3
      %p399 = pnand %p397, %p398
      %p400 = pneg %p399
      // Predicated region
      $region69: #{tpu_custom_call.1} parent=5 // pred_check
        _
      $region70: #{tpu_custom_call.1} parent=5 // pred_check_branch
        %402 = sbr.rel (%p399) target = $region72
      $region71: #{tpu_custom_call.1} parent=5 // pred_region
        %s403 = ssub.s32 %s22, 1
        %p404 = scmp.lt.s32.totalorder %s27, 1
        %s405 = scalar_select %p404, %s27, 1
        %s406 = smul.addr %s405, 8
        %s407 = scalar_lea.vmem %s0, %s406
        %p408 = pneg %p48
        %p409 = pneg %p45
        %p410 = scmp.lt.s32.totalorder %s27, 1
        %s411 = scalar_select %p410, %s27, 1
        %s412 = smul.addr %s411, 8
        %s413 = scalar_lea.vmem %s1, %s412
        %p414 = pneg %p74
        %p415 = pneg %p71
        %p416 = pneg %p95
        %p417 = pneg %p92
        %p418 = pneg %p116
        %p419 = pneg %p113
        %p420 = pneg %p137
        %p421 = pneg %p134
        %p422 = pneg %p158
        %p423 = pneg %p155
        %p424 = pneg %p179
        %p425 = pneg %p176
        %p426 = pneg %p200
        %p427 = pneg %p197
        %p428 = pneg %p221
        %p429 = pneg %p218
        %p430 = pneg %p242
        %p431 = pneg %p239
        %p432 = pneg %p263
        %p433 = pneg %p260
        %p434 = pneg %p284
        %p435 = pneg %p281
        %p436 = pneg %p305
        %p437 = pneg %p302
        %p438 = pneg %p331
        %p439 = pneg %p328
        %s440 = sand.u32 %s318, 1
        %s441 = scalar_lea.sflag [#allocation3], %s440
        %s442 = sand.u32 %s318, 1
        %s443 = smul.addr %s442, 8
        %s444 = scalar_lea.vmem [#allocation2], %s443
        %p445 = scmp.lt.s32.totalorder %s27, 1
        %s446 = scalar_select %p445, %s27, 1
        %s447 = smul.addr %s446, 8
        %s448 = scalar_lea.vmem %s0, %s447
        %p449 = scmp.lt.s32.totalorder %s27, 1
        %s450 = scalar_select %p449, %s27, 1
        %s451 = smul.addr %s450, 8
        %s452 = scalar_lea.vmem %s1, %s451
        %v453 = vld [vmem:[%s448] sm:$0xff]
        %v454 = vmul.f32 %v453, 2.0
        %v455 = vsub.f32 %v454, 1.0
        %v456 = vld [vmem:[%s452] sm:$0xff]
        %v457 = vsub.f32 %v456, -1.0
        %v458 = vmul.f32 %v457, 2.0
        %v459 = vrcp.pop 2.0
        %v460 = vmul.f32 %v458, %v459
        %v461 = vsub.f32 %v460, 1.0
        %v462 = vld [vmem:[%s2] sm:$0x1]
        %v464 = vlaneseq
        %v465 = vshrl.u32 %v464, 7
        %v466 = vsub.s32 0, %v465
        %v467 = vrot.slane %v462, %v466
        %468 = vrot.lane.b32.xlu0 %v467, 4
        %v469 = vpop.permute.xlu0 %468
        %472 = vrot.lane.b32.xlu0 %v461, 12
        %v473 = vpop.permute.xlu0 %472
        %vm475 = vcmask 31744
        %v476 = vsel %vm475, %v455, %v469
        %vm477 = vcmask 97280
        %v478 = vsel %vm477, %v476, %v473
        %v479 = vld [vmem:[%s3] sm:$0xff]
        %v480 = vld [vmem:[%s3 + $0x8] sm:$0xff]
        %v481 = vld [vmem:[%s4] sm:$0x1]
        %v483 = vlaneseq
        %v484 = vshrl.u32 %v483, 7
        %v485 = vsub.s32 0, %v484
        %v486 = vrot.slane %v481, %v485
        %vm488 = vcmask 130048
        %v490 = vsel %vm488, %v478, 0
        %492 = vmatprep.subr.mxu0 0.0
        %493 = vmatpush1.msra.mxu0 %v479
        %494 = vmatprep.subr.mxu0 0.0
        %495 = vmatpush1.msra.mxu0 %v480
        %496 = vmatprep.subr.mxu0 0.0
        %497 = vmatpush1.msra.mxu0 0.0
        %498 = vmatprep.subr.mxu0 0.0
        %499 = vmatpush1.msra.mxu0 0.0
        %500 = vmatprep.subr.mxu0 0.0
        %501 = vmatpush1.msra.mxu0 0.0
        %502 = vmatprep.subr.mxu0 0.0
        %503 = vmatpush1.msra.mxu0 0.0
        %504 = vmatprep.subr.mxu0 0.0
        %505 = vmatpush1.msra.mxu0 0.0
        %506 = vmatprep.subr.mxu0 0.0
        %507 = vmatpush1.msra.mxu0 0.0
        %508 = vmatprep.subr.mxu0 0.0
        %509 = vmatpush1.msra.mxu0 0.0
        %510 = vmatprep.subr.mxu0 0.0
        %511 = vmatpush1.msra.mxu0 0.0
        %512 = vmatprep.subr.mxu0 0.0
        %513 = vmatpush1.msra.mxu0 0.0
        %514 = vmatprep.subr.mxu0 0.0
        %515 = vmatpush1.msra.mxu0 0.0
        %516 = vmatprep.subr.mxu0 0.0
        %517 = vmatpush1.msra.mxu0 0.0
        %518 = vmatprep.subr.mxu0 0.0
        %519 = vmatpush1.msra.mxu0 0.0
        %520 = vmatprep.subr.mxu0 0.0
        %521 = vmatpush1.msra.mxu0 0.0
        %522 = vmatprep.subr.mxu0 0.0
        %523 = vmatpush1.msra.mxu0 0.0
        %524 = vmatprep.subr.mxu0 0.0
        %525 = vmatpush1.msra.mxu0 0.0
        %526 = vmatprep.subr.mxu0 0.0
        %527 = vmatpush1.msra.mxu0 0.0
        %528 = vmatprep.subr.mxu0 0.0
        %529 = vmatpush1.msra.mxu0 0.0
        %530 = vmatprep.subr.mxu0 0.0
        %531 = vmatpush1.msra.mxu0 0.0
        %532 = vmatprep.subr.mxu0 0.0
        %533 = vmatpush1.msra.mxu0 0.0
        %534 = vmatprep.subr.mxu0 0.0
        %535 = vmatpush1.msra.mxu0 0.0
        %536 = vmatprep.subr.mxu0 0.0
        %537 = vmatpush1.msra.mxu0 0.0
        %538 = vmatprep.subr.mxu0 0.0
        %539 = vmatpush1.msra.mxu0 0.0
        %540 = vmatprep.subr.mxu0 0.0
        %541 = vmatpush1.msra.mxu0 0.0
        %542 = vmatprep.subr.mxu0 0.0
        %543 = vmatpush1.msra.mxu0 0.0
        %544 = vmatprep.subr.mxu0 0.0
        %545 = vmatpush1.msra.mxu0 0.0
        %546 = vmatprep.subr.mxu0 0.0
        %547 = vmatpush1.msra.mxu0 0.0
        %548 = vmatprep.subr.mxu0 0.0
        %549 = vmatpush1.msra.mxu0 0.0
        %550 = vmatprep.subr.mxu0 0.0
        %551 = vmatpush1.msra.mxu0 0.0
        %552 = vmatprep.subr.mxu0 0.0
        %553 = vmatpush1.msra.mxu0 0.0
        %554 = vmatprep.subr.mxu0 0.0
        %555 = vmatpush1.msra.mxu0 0.0
        %556 = vmatprep.mubr.f32.mxu0 0.0
        %557 = vmatmul.mubr.f32.gmra.mrb[0].mxu0 %v490
        %v558 = vpop.f32.mrb[0].mxu0
        %v559 = vadd.f32 %v486, %v558
        %v560 = vpop.f32.mrb[0].mxu0
        %561 = vdwg.mxu0
        %vm562 = vcmp.gt.f32.partialorder %v559, 0.0
        %v563 = vmul.f32 %v559, 0.01
        %v564 = vsel %vm562, %v559, %v563
        %v565 = vld [vmem:[%s5] sm:$0xff]
        %v566 = vld [vmem:[%s5 + $0x8] sm:$0xff]
        %v567 = vld [vmem:[%s5 + $0x10] sm:$0xff]
        %v568 = vld [vmem:[%s5 + $0x18] sm:$0xff]
        %v569 = vld [vmem:[%s5 + $0x20] sm:$0xff]
        %v570 = vld [vmem:[%s5 + $0x28] sm:$0xff]
        %v571 = vld [vmem:[%s5 + $0x30] sm:$0xff]
        %v572 = vld [vmem:[%s5 + $0x38] sm:$0xff]
        %v573 = vld [vmem:[%s5 + $0x40] sm:$0xff]
        %v574 = vld [vmem:[%s5 + $0x48] sm:$0xff]
        %v575 = vld [vmem:[%s5 + $0x50] sm:$0xff]
        %v576 = vld [vmem:[%s5 + $0x58] sm:$0xff]
        %v577 = vld [vmem:[%s6] sm:$0x1]
        %v579 = vlaneseq
        %v580 = vshrl.u32 %v579, 7
        %v581 = vsub.s32 0, %v580
        %v582 = vrot.slane %v577, %v581
        %vm584 = vcmask 785408
        %v586 = vsel %vm584, %v564, 0
        %588 = vmatprep.subr.mxu0 0.0
        %589 = vmatpush1.msra.mxu0 %v565
        %590 = vmatprep.subr.mxu0 0.0
        %591 = vmatpush1.msra.mxu0 %v566
        %592 = vmatprep.subr.mxu0 0.0
        %593 = vmatpush1.msra.mxu0 %v567
        %594 = vmatprep.subr.mxu0 0.0
        %595 = vmatpush1.msra.mxu0 %v568
        %596 = vmatprep.subr.mxu0 0.0
        %597 = vmatpush1.msra.mxu0 %v569
        %598 = vmatprep.subr.mxu0 0.0
        %599 = vmatpush1.msra.mxu0 %v570
        %600 = vmatprep.subr.mxu0 0.0
        %601 = vmatpush1.msra.mxu0 %v571
        %602 = vmatprep.subr.mxu0 0.0
        %603 = vmatpush1.msra.mxu0 %v572
        %604 = vmatprep.subr.mxu0 0.0
        %605 = vmatpush1.msra.mxu0 %v573
        %606 = vmatprep.subr.mxu0 0.0
        %607 = vmatpush1.msra.mxu0 %v574
        %608 = vmatprep.subr.mxu0 0.0
        %609 = vmatpush1.msra.mxu0 %v575
        %610 = vmatprep.subr.mxu0 0.0
        %611 = vmatpush1.msra.mxu0 %v576
        %612 = vmatprep.subr.mxu0 0.0
        %613 = vmatpush1.msra.mxu0 0.0
        %614 = vmatprep.subr.mxu0 0.0
        %615 = vmatpush1.msra.mxu0 0.0
        %616 = vmatprep.subr.mxu0 0.0
        %617 = vmatpush1.msra.mxu0 0.0
        %618 = vmatprep.subr.mxu0 0.0
        %619 = vmatpush1.msra.mxu0 0.0
        %620 = vmatprep.subr.mxu0 0.0
        %621 = vmatpush1.msra.mxu0 0.0
        %622 = vmatprep.subr.mxu0 0.0
        %623 = vmatpush1.msra.mxu0 0.0
        %624 = vmatprep.subr.mxu0 0.0
        %625 = vmatpush1.msra.mxu0 0.0
        %626 = vmatprep.subr.mxu0 0.0
        %627 = vmatpush1.msra.mxu0 0.0
        %628 = vmatprep.subr.mxu0 0.0
        %629 = vmatpush1.msra.mxu0 0.0
        %630 = vmatprep.subr.mxu0 0.0
        %631 = vmatpush1.msra.mxu0 0.0
        %632 = vmatprep.subr.mxu0 0.0
        %633 = vmatpush1.msra.mxu0 0.0
        %634 = vmatprep.subr.mxu0 0.0
        %635 = vmatpush1.msra.mxu0 0.0
        %636 = vmatprep.subr.mxu0 0.0
        %637 = vmatpush1.msra.mxu0 0.0
        %638 = vmatprep.subr.mxu0 0.0
        %639 = vmatpush1.msra.mxu0 0.0
        %640 = vmatprep.subr.mxu0 0.0
        %641 = vmatpush1.msra.mxu0 0.0
        %642 = vmatprep.subr.mxu0 0.0
        %643 = vmatpush1.msra.mxu0 0.0
        %644 = vmatprep.subr.mxu0 0.0
        %645 = vmatpush1.msra.mxu0 0.0
        %646 = vmatprep.subr.mxu0 0.0
        %647 = vmatpush1.msra.mxu0 0.0
        %648 = vmatprep.subr.mxu0 0.0
        %649 = vmatpush1.msra.mxu0 0.0
        %650 = vmatprep.subr.mxu0 0.0
        %651 = vmatpush1.msra.mxu0 0.0
        %652 = vmatprep.mubr.f32.mxu0 0.0
        %653 = vmatmul.mubr.f32.gmra.mrb[0].mxu0 %v586
        %v654 = vpop.f32.mrb[0].mxu0
        %v655 = vadd.f32 %v582, %v654
        %v656 = vpop.f32.mrb[0].mxu0
        %657 = vdwg.mxu0
        %vm658 = vcmp.gt.f32.partialorder %v655, 0.0
        %v659 = vmul.f32 %v655, 0.01
        %v660 = vsel %vm658, %v655, %v659
        %v661 = vld [vmem:[%s7] sm:$0xff]
        %v662 = vld [vmem:[%s7 + $0x8] sm:$0xff]
        %v663 = vld [vmem:[%s7 + $0x10] sm:$0xff]
        %v664 = vld [vmem:[%s7 + $0x18] sm:$0xff]
        %v665 = vld [vmem:[%s7 + $0x20] sm:$0xff]
        %v666 = vld [vmem:[%s7 + $0x28] sm:$0xff]
        %v667 = vld [vmem:[%s7 + $0x30] sm:$0xff]
        %v668 = vld [vmem:[%s7 + $0x38] sm:$0xff]
        %v669 = vld [vmem:[%s7 + $0x40] sm:$0xff]
        %v670 = vld [vmem:[%s7 + $0x48] sm:$0xff]
        %v671 = vld [vmem:[%s7 + $0x50] sm:$0xff]
        %v672 = vld [vmem:[%s7 + $0x58] sm:$0xff]
        %v673 = vld [vmem:[%s8] sm:$0x1]
        %v675 = vlaneseq
        %v676 = vshrl.u32 %v675, 7
        %v677 = vsub.s32 0, %v676
        %v678 = vrot.slane %v673, %v677
        %v681 = vsel %vm584, %v660, 0
        %683 = vmatprep.subr.mxu0 0.0
        %684 = vmatpush1.msra.mxu0 %v661
        %685 = vmatprep.subr.mxu0 0.0
        %686 = vmatpush1.msra.mxu0 %v662
        %687 = vmatprep.subr.mxu0 0.0
        %688 = vmatpush1.msra.mxu0 %v663
        %689 = vmatprep.subr.mxu0 0.0
        %690 = vmatpush1.msra.mxu0 %v664
        %691 = vmatprep.subr.mxu0 0.0
        %692 = vmatpush1.msra.mxu0 %v665
        %693 = vmatprep.subr.mxu0 0.0
        %694 = vmatpush1.msra.mxu0 %v666
        %695 = vmatprep.subr.mxu0 0.0
        %696 = vmatpush1.msra.mxu0 %v667
        %697 = vmatprep.subr.mxu0 0.0
        %698 = vmatpush1.msra.mxu0 %v668
        %699 = vmatprep.subr.mxu0 0.0
        %700 = vmatpush1.msra.mxu0 %v669
        %701 = vmatprep.subr.mxu0 0.0
        %702 = vmatpush1.msra.mxu0 %v670
        %703 = vmatprep.subr.mxu0 0.0
        %704 = vmatpush1.msra.mxu0 %v671
        %705 = vmatprep.subr.mxu0 0.0
        %706 = vmatpush1.msra.mxu0 %v672
        %707 = vmatprep.subr.mxu0 0.0
        %708 = vmatpush1.msra.mxu0 0.0
        %709 = vmatprep.subr.mxu0 0.0
        %710 = vmatpush1.msra.mxu0 0.0
        %711 = vmatprep.subr.mxu0 0.0
        %712 = vmatpush1.msra.mxu0 0.0
        %713 = vmatprep.subr.mxu0 0.0
        %714 = vmatpush1.msra.mxu0 0.0
        %715 = vmatprep.subr.mxu0 0.0
        %716 = vmatpush1.msra.mxu0 0.0
        %717 = vmatprep.subr.mxu0 0.0
        %718 = vmatpush1.msra.mxu0 0.0
        %719 = vmatprep.subr.mxu0 0.0
        %720 = vmatpush1.msra.mxu0 0.0
        %721 = vmatprep.subr.mxu0 0.0
        %722 = vmatpush1.msra.mxu0 0.0
        %723 = vmatprep.subr.mxu0 0.0
        %724 = vmatpush1.msra.mxu0 0.0
        %725 = vmatprep.subr.mxu0 0.0
        %726 = vmatpush1.msra.mxu0 0.0
        %727 = vmatprep.subr.mxu0 0.0
        %728 = vmatpush1.msra.mxu0 0.0
        %729 = vmatprep.subr.mxu0 0.0
        %730 = vmatpush1.msra.mxu0 0.0
        %731 = vmatprep.subr.mxu0 0.0
        %732 = vmatpush1.msra.mxu0 0.0
        %733 = vmatprep.subr.mxu0 0.0
        %734 = vmatpush1.msra.mxu0 0.0
        %735 = vmatprep.subr.mxu0 0.0
        %736 = vmatpush1.msra.mxu0 0.0
        %737 = vmatprep.subr.mxu0 0.0
        %738 = vmatpush1.msra.mxu0 0.0
        %739 = vmatprep.subr.mxu0 0.0
        %740 = vmatpush1.msra.mxu0 0.0
        %741 = vmatprep.subr.mxu0 0.0
        %742 = vmatpush1.msra.mxu0 0.0
        %743 = vmatprep.subr.mxu0 0.0
        %744 = vmatpush1.msra.mxu0 0.0
        %745 = vmatprep.subr.mxu0 0.0
        %746 = vmatpush1.msra.mxu0 0.0
        %747 = vmatprep.mubr.f32.mxu0 0.0
        %748 = vmatmul.mubr.f32.gmra.mrb[0].mxu0 %v681
        %v749 = vpop.f32.mrb[0].mxu0
        %v750 = vadd.f32 %v678, %v749
        %v751 = vpop.f32.mrb[0].mxu0
        %752 = vdwg.mxu0
        %v753 = vld [vmem:[%s9] sm:$0x1]
        %v755 = vlaneseq
        %v756 = vshrl.u32 %v755, 7
        %v757 = vsub.s32 0, %v756
        %v758 = vrot.slane %v753, %v757
        %761 = vrot.lane.b32.xlu0 %v750, 116
        %v762 = vpop.permute.xlu0 %761
        %v764 = vsub.f32 %v758, %v762
        %v765 = vmax.f32 %v764, 0.0
        %v766 = vand.u32 2147483647, %v764
        %v767 = vsub.f32 0.0, %v766
        %v768 = vmul.f32 %v767, 1.442695
        %v769 = vpow.pop %v768
        %v770 = vadd.f32 %v769, 1.0
        %v771 = vlog2.pop %v770
        %v772 = vmul.f32 %v771, 0.6931472
        %v773 = vadd.f32 %v765, %v772
        %v774 = vsub.f32 %v758, %v773
        %v775 = vld [vmem:[%s10] sm:$0x1]
        %v777 = vlaneseq
        %v778 = vshrl.u32 %v777, 7
        %v779 = vsub.s32 0, %v778
        %v780 = vrot.slane %v775, %v779
        %v782 = vsub.f32 %v774, %v780
        %v783 = vmax.f32 %v782, 0.0
        %v784 = vand.u32 2147483647, %v782
        %v785 = vsub.f32 0.0, %v784
        %v786 = vmul.f32 %v785, 1.442695
        %v787 = vpow.pop %v786
        %v788 = vadd.f32 %v787, 1.0
        %v789 = vlog2.pop %v788
        %v790 = vmul.f32 %v789, 0.6931472
        %v791 = vadd.f32 %v783, %v790
        %v792 = vadd.f32 %v780, %v791
        %v793 = vmul.f32 %v792, 1.442695
        %v794 = vpow.pop %v793
        %795 = vrot.lane.b32.xlu0 %v750, 124
        %v796 = vpop.permute.xlu0 %795
        %v798 = vadd.f32 %v750, %v796
        %800 = vrot.lane.b32.xlu0 %v794, 124
        %v801 = vpop.permute.xlu0 %800
        %v803 = vadd.f32 %v794, %v801
        %804 = vrot.lane.b32.xlu0 %v750, 120
        %v805 = vpop.permute.xlu0 %804
        %v807 = vadd.f32 %v798, %v805
        %808 = vrot.lane.b32.xlu0 %v794, 120
        %v809 = vpop.permute.xlu0 %808
        %v811 = vadd.f32 %v803, %v809
        %v812 = vmul.f32 %v807, 0.33333334
        %v813 = vmul.f32 %v811, 0.33333334
        %815 = vrot.lane.b32.xlu0 %v812, 4
        %v816 = vpop.permute.xlu0 %815
        %818 = vrot.lane.b32.xlu0 %v812, 8
        %v819 = vpop.permute.xlu0 %818
        %v821 = vsel %vm475, %v812, %v816
        %vm822 = vcmask 64512
        %v823 = vsel %vm822, %v821, %v819
        %v824 = vsub.f32 %v750, %v823
        %v825 = vld [vmem:[%s11] sm:$0xff]
        %v826 = vld [vmem:[%s11 + $0x8] sm:$0xf]
        %v828 = vsel %vm477, %v824, 0
        %vm830 = vcmask 1043456
        %v832 = vsel %vm830, %v826, 0
        %834 = vmatprep.subr.mxu0 0.0
        %835 = vmatpush1.msra.mxu0 %v825
        %836 = vmatprep.subr.mxu0 0.0
        %837 = vmatpush1.msra.mxu0 %v832
        %838 = vmatprep.subr.mxu0 0.0
        %839 = vmatpush1.msra.mxu0 0.0
        %840 = vmatprep.subr.mxu0 0.0
        %841 = vmatpush1.msra.mxu0 0.0
        %842 = vmatprep.subr.mxu0 0.0
        %843 = vmatpush1.msra.mxu0 0.0
        %844 = vmatprep.subr.mxu0 0.0
        %845 = vmatpush1.msra.mxu0 0.0
        %846 = vmatprep.subr.mxu0 0.0
        %847 = vmatpush1.msra.mxu0 0.0
        %848 = vmatprep.subr.mxu0 0.0
        %849 = vmatpush1.msra.mxu0 0.0
        %850 = vmatprep.subr.mxu0 0.0
        %851 = vmatpush1.msra.mxu0 0.0
        %852 = vmatprep.subr.mxu0 0.0
        %853 = vmatpush1.msra.mxu0 0.0
        %854 = vmatprep.subr.mxu0 0.0
        %855 = vmatpush1.msra.mxu0 0.0
        %856 = vmatprep.subr.mxu0 0.0
        %857 = vmatpush1.msra.mxu0 0.0
        %858 = vmatprep.subr.mxu0 0.0
        %859 = vmatpush1.msra.mxu0 0.0
        %860 = vmatprep.subr.mxu0 0.0
        %861 = vmatpush1.msra.mxu0 0.0
        %862 = vmatprep.subr.mxu0 0.0
        %863 = vmatpush1.msra.mxu0 0.0
        %864 = vmatprep.subr.mxu0 0.0
        %865 = vmatpush1.msra.mxu0 0.0
        %866 = vmatprep.subr.mxu0 0.0
        %867 = vmatpush1.msra.mxu0 0.0
        %868 = vmatprep.subr.mxu0 0.0
        %869 = vmatpush1.msra.mxu0 0.0
        %870 = vmatprep.subr.mxu0 0.0
        %871 = vmatpush1.msra.mxu0 0.0
        %872 = vmatprep.subr.mxu0 0.0
        %873 = vmatpush1.msra.mxu0 0.0
        %874 = vmatprep.subr.mxu0 0.0
        %875 = vmatpush1.msra.mxu0 0.0
        %876 = vmatprep.subr.mxu0 0.0
        %877 = vmatpush1.msra.mxu0 0.0
        %878 = vmatprep.subr.mxu0 0.0
        %879 = vmatpush1.msra.mxu0 0.0
        %880 = vmatprep.subr.mxu0 0.0
        %881 = vmatpush1.msra.mxu0 0.0
        %882 = vmatprep.subr.mxu0 0.0
        %883 = vmatpush1.msra.mxu0 0.0
        %884 = vmatprep.subr.mxu0 0.0
        %885 = vmatpush1.msra.mxu0 0.0
        %886 = vmatprep.subr.mxu0 0.0
        %887 = vmatpush1.msra.mxu0 0.0
        %888 = vmatprep.subr.mxu0 0.0
        %889 = vmatpush1.msra.mxu0 0.0
        %890 = vmatprep.subr.mxu0 0.0
        %891 = vmatpush1.msra.mxu0 0.0
        %892 = vmatprep.subr.mxu0 0.0
        %893 = vmatpush1.msra.mxu0 0.0
        %894 = vmatprep.subr.mxu0 0.0
        %895 = vmatpush1.msra.mxu0 0.0
        %896 = vmatprep.subr.mxu0 0.0
        %897 = vmatpush1.msra.mxu0 0.0
        %898 = vmatprep.mubr.f32.mxu0 0.0
        %899 = vmatmul.mubr.f32.gmra.mrb[0].mxu0 %v828
        %v900 = vpop.f32.mrb[0].mxu0
        %v901 = vadd.f32 0.0, %v900
        %v902 = vpop.f32.mrb[0].mxu0
        %903 = vdwg.mxu0
        %v904 = vld [vmem:[%s12] sm:$0xff]
        %v905 = vld [vmem:[%s12 + $0x8] sm:$0xf]
        %v907 = vsel %vm830, %v905, 0
        %909 = vmatprep.subr.mxu0 0.0
        %910 = vmatpush1.msra.mxu0 %v904
        %911 = vmatprep.subr.mxu0 0.0
        %912 = vmatpush1.msra.mxu0 %v907
        %913 = vmatprep.subr.mxu0 0.0
        %914 = vmatpush1.msra.mxu0 0.0
        %915 = vmatprep.subr.mxu0 0.0
        %916 = vmatpush1.msra.mxu0 0.0
        %917 = vmatprep.subr.mxu0 0.0
        %918 = vmatpush1.msra.mxu0 0.0
        %919 = vmatprep.subr.mxu0 0.0
        %920 = vmatpush1.msra.mxu0 0.0
        %921 = vmatprep.subr.mxu0 0.0
        %922 = vmatpush1.msra.mxu0 0.0
        %923 = vmatprep.subr.mxu0 0.0
        %924 = vmatpush1.msra.mxu0 0.0
        %925 = vmatprep.subr.mxu0 0.0
        %926 = vmatpush1.msra.mxu0 0.0
        %927 = vmatprep.subr.mxu0 0.0
        %928 = vmatpush1.msra.mxu0 0.0
        %929 = vmatprep.subr.mxu0 0.0
        %930 = vmatpush1.msra.mxu0 0.0
        %931 = vmatprep.subr.mxu0 0.0
        %932 = vmatpush1.msra.mxu0 0.0
        %933 = vmatprep.subr.mxu0 0.0
        %934 = vmatpush1.msra.mxu0 0.0
        %935 = vmatprep.subr.mxu0 0.0
        %936 = vmatpush1.msra.mxu0 0.0
        %937 = vmatprep.subr.mxu0 0.0
        %938 = vmatpush1.msra.mxu0 0.0
        %939 = vmatprep.subr.mxu0 0.0
        %940 = vmatpush1.msra.mxu0 0.0
        %941 = vmatprep.subr.mxu0 0.0
        %942 = vmatpush1.msra.mxu0 0.0
        %943 = vmatprep.subr.mxu0 0.0
        %944 = vmatpush1.msra.mxu0 0.0
        %945 = vmatprep.subr.mxu0 0.0
        %946 = vmatpush1.msra.mxu0 0.0
        %947 = vmatprep.subr.mxu0 0.0
        %948 = vmatpush1.msra.mxu0 0.0
        %949 = vmatprep.subr.mxu0 0.0
        %950 = vmatpush1.msra.mxu0 0.0
        %951 = vmatprep.subr.mxu0 0.0
        %952 = vmatpush1.msra.mxu0 0.0
        %953 = vmatprep.subr.mxu0 0.0
        %954 = vmatpush1.msra.mxu0 0.0
        %955 = vmatprep.subr.mxu0 0.0
        %956 = vmatpush1.msra.mxu0 0.0
        %957 = vmatprep.subr.mxu0 0.0
        %958 = vmatpush1.msra.mxu0 0.0
        %959 = vmatprep.subr.mxu0 0.0
        %960 = vmatpush1.msra.mxu0 0.0
        %961 = vmatprep.subr.mxu0 0.0
        %962 = vmatpush1.msra.mxu0 0.0
        %963 = vmatprep.subr.mxu0 0.0
        %964 = vmatpush1.msra.mxu0 0.0
        %965 = vmatprep.subr.mxu0 0.0
        %966 = vmatpush1.msra.mxu0 0.0
        %967 = vmatprep.subr.mxu0 0.0
        %968 = vmatpush1.msra.mxu0 0.0
        %969 = vmatprep.subr.mxu0 0.0
        %970 = vmatpush1.msra.mxu0 0.0
        %971 = vmatprep.subr.mxu0 0.0
        %972 = vmatpush1.msra.mxu0 0.0
        %973 = vmatprep.mubr.f32.mxu0 0.0
        %974 = vmatmul.mubr.f32.gmra.mrb[0].mxu0 %v828
        %v975 = vpop.f32.mrb[0].mxu0
        %v976 = vadd.f32 0.0, %v975
        %v977 = vpop.f32.mrb[0].mxu0
        %978 = vdwg.mxu0
        %v979 = vmul.f32 %v901, %v976
        %981 = vrot.lane.b32.xlu0 %v979, 112
        %v982 = vpop.permute.xlu0 %981
        %v984 = vadd.f32 %v979, %v982
        %985 = vrot.lane.b32.xlu0 %v979, 96
        %v986 = vpop.permute.xlu0 %985
        %v988 = vadd.f32 %v984, %v986
        %v989 = vmul.f32 %v988, 0.5
        %991 = vrot.lane.b32.xlu0 %v813, 4
        %v992 = vpop.permute.xlu0 %991
        %995 = vrot.lane.b32.xlu0 %v989, 8
        %v996 = vpop.permute.xlu0 %995
        %v998 = vsel %vm475, %v812, %v992
        %v999 = vsel %vm822, %v998, %v996
        %vm1000 = vcmask 195584
        %v1001 = vsel %vm1000, %v999, 0.0
        %1002 = vst [vmem:[%s444] sm:$0xff] %v1001
        %s1003 = sand.u32 %s318, 1
        %s1004 = scalar_lea.sflag [#allocation3], %s1003
        %s1005 = sand.u32 %s318, 1
        %s1006 = smul.addr %s1005, 8
        %s1007 = scalar_lea.vmem [#allocation2], %s1006
        // Predicated region
        $region73: #{tpu_custom_call.1} parent=71 // pred_check
          %p1008 = pneg %p328
        $region74: #{tpu_custom_call.1} parent=71 // pred_check_branch
          %1010 = sbr.rel (%p1008) target = $region76
        $region75: #{tpu_custom_call.1} parent=71 // pred_region
          %s1012 = ssub.s32 128, 128
          %1013 = vsyncadd %s1004, %s1012
          %s1014 = smul.addr %s27, 128
          %s1015 = scalar_lea.hbm %s13, %s1014
          %s1017 = sshll.u32 %s1007, 4
          %s1018 = int_to_ptr.vmem [resolvable:$true] %s1017
          %1020 = dma.vmem_to_hbm [thread:$0]  %s1018, 128, %s1015, %s1004
        $region76: #{tpu_custom_call.1} parent=71 // pred_fallthru
          _
      $region72: #{tpu_custom_call.1} parent=5 // pred_fallthru
        _
      %p1021 = scmp.le.s32.totalorder 2, %s22
      // Predicated region
      $region77: #{tpu_custom_call.1} parent=5 // pred_check
        %p1022 = pneg %p1021
      $region78: #{tpu_custom_call.1} parent=5 // pred_check_branch
        %1024 = sbr.rel (%p1022) target = $region80
      $region79: #{tpu_custom_call.1} parent=5 // pred_region
        %s1025 = ssub.s32 %s22, 2
        // Predicated region
        $region81: #{tpu_custom_call.1} parent=79 // pred_check
          %p1026 = pneg %p334
        $region82: #{tpu_custom_call.1} parent=79 // pred_check_branch
          %1028 = sbr.rel (%p1026) target = $region84
        $region83: #{tpu_custom_call.1} parent=79 // pred_region
          %s1029 = sand.u32 %s319, 1
          %s1030 = scalar_lea.sflag [#allocation3], %s1029
          %s1031 = sand.u32 %s319, 1
          %s1032 = smul.addr %s1031, 8
          %s1033 = scalar_lea.vmem [#allocation2], %s1032
          %1034 = dma.done %s1030, 128
        $region84: #{tpu_custom_call.1} parent=79 // pred_fallthru
          _
      $region80: #{tpu_custom_call.1} parent=5 // pred_fallthru
        _
    $region6: #{tpu_custom_call.1} parent=1 // loop_footer
      %s26 = sadd.s32 1, %s22
    $region7: #{tpu_custom_call.1} parent=1 // loop_footer_branch
      %21 = sbr.rel target = $region3
    $region8: #{tpu_custom_call.1} parent=1 // loop_exit
      _
    %1035 = vsyncpa [#allocation3], 1
    %s1036 = scalar_lea.sflag [#allocation3], 1
    %1037 = vsyncpa %s1036, 1

</llo_original>
